<compile_context>
chip_gen: v6e
topology: v6e:2x2x1
jax: 0.10.0
libtpu: 0.0.40
codegen_flags: <defaults>
</compile_context>

<pallas_src>
import functools

import jax
import jax.numpy as jnp
from jax import lax
from jax.experimental import pallas as pl
from jax.experimental.pallas import tpu as pltpu


def _boostabs_kernel(s_ref, a_ref, row_out_ref, col_out_ref, row_acc,
                     *, margin_neg, block_m, block_n):
    i = pl.program_id(0)
    j = pl.program_id(1)
    nj = pl.num_programs(1)

    s = s_ref[...].astype(jnp.float32)          # cast per tile, after the DMA
    a = a_ref[...].astype(jnp.float32)

    # hinge on negatives: clamp(margin_neg + scores - scores_anchor, 0) >= 0
    c = jnp.maximum(margin_neg + s - a, 0.0)

    # --- start of a row of tiles: reset the running row maxima --------------
    @pl.when(j == 0)
    def _():
        row_acc[...] = jnp.zeros_like(row_acc)   # 0 is the identity (c >= 0)

    row0 = i * block_m
    col0 = pl.multiple_of(j * block_n, block_n)

    def _fold(cm):
        # running row maxima across the j sweep
        row_acc[...] = jnp.maximum(row_acc[...],
                                   jnp.max(cm, axis=1, keepdims=True))
        # per-(i,j) column maxima, written once into the resident (1,1,N) block
        col_out_ref[:, :, pl.ds(col0, block_n)] = (
            jnp.max(cm, axis=0, keepdims=True).reshape(1, 1, block_n))

    # Does this tile intersect the global diagonal?  (range-overlap predicate,
    # valid for bm != bn as well.)  Mask work only runs on those tiles.
    on_diag = jnp.logical_and(row0 < j * block_n + block_n,
                              j * block_n < row0 + block_m)

    @pl.when(on_diag)
    def _():
        rg = row0 + lax.broadcasted_iota(jnp.int32, (block_m, block_n), 0)
        cg = j * block_n + lax.broadcasted_iota(jnp.int32, (block_m, block_n), 1)
        _fold(jnp.where(rg == cg, 0.0, c))       # masked_fill_ on the diagonal

    @pl.when(jnp.logical_not(on_diag))
    def _():
        _fold(c)

    # --- end of a row of tiles: emit the per-row-block partial sum ----------
    @pl.when(j == nj - 1)
    def _():
        row_out_ref[...] = jnp.sum(row_acc[...]).reshape(1, 1, 1)


def _largest_divisor(n, multiple, cap):
    """Largest divisor of n that is a multiple of `multiple` and <= cap (0 if none)."""
    best = 0
    d = multiple
    limit = min(n, cap)
    while d <= limit:
        if n % d == 0:
            best = d
        d += multiple
    return best


def _pick_blocks(n, itemsize, max_tile_bytes=4 << 20):
    """Lane-wide tiles: bn up to 2048 (multiple of 128), bm sized to ~4 MiB/tile."""
    bn = _largest_divisor(n, 128, 2048) or n          # fallback: full width
    max_bm = max(8, max_tile_bytes // max(1, bn * itemsize))
    bm = _largest_divisor(n, 8, min(n, max_bm)) or n  # fallback: full height
    return bm, bn


def boostabs_loss(scores, scores_anchor, margin=0.0, beta=1.0, gamma=0.5,
                  block_m=None, block_n=None):
    """Pallas TPU implementation of BoostabsLoss.forward (returns a scalar)."""
    n = scores.shape[0]
    assert scores.shape == (n, n), "scores must be square"
    assert scores_anchor.shape == (n, n), "scores_anchor must match scores"

    m = float(margin) * float(beta)
    margin_pos = m * float(gamma)
    margin_neg = m * (1.0 - float(gamma))

    itemsize = jnp.dtype(scores.dtype).itemsize
    auto_bm, auto_bn = _pick_blocks(n, itemsize)
    bm = block_m if block_m is not None else auto_bm
    bn = block_n if block_n is not None else auto_bn
    assert n % bm == 0 and n % bn == 0, "block sizes must divide N"
    ni, nj = n // bm, n // bn

    kernel = functools.partial(_boostabs_kernel, margin_neg=margin_neg,
                               block_m=bm, block_n=bn)

    # VMEM budget: 2 inputs x 2 buffers x tile + resident col block + scratch.
    footprint = 4 * bm * bn * itemsize + 2 * 4 * (n + 1) + 4 * bm
    vmem_limit = int(min(48 << 20, max(32 << 20, 2 * footprint)))

    row_part, col_part = pl.pallas_call(
        kernel,
        out_shape=(
            jax.ShapeDtypeStruct((ni, 1, 1), jnp.float32),   # sum of row maxima
            jax.ShapeDtypeStruct((ni, 1, n), jnp.float32),   # col-max partials
        ),
        grid_spec=pltpu.PrefetchScalarGridSpec(
            num_scalar_prefetch=0,
            grid=(ni, nj),
            in_specs=[
                pl.BlockSpec((bm, bn), lambda i, j: (i, j)),   # scores tile
                pl.BlockSpec((bm, bn), lambda i, j: (i, j)),   # anchor tile
            ],
            out_specs=[
                pl.BlockSpec((1, 1, 1), lambda i, j: (i, 0, 0)),
                pl.BlockSpec((1, 1, n), lambda i, j: (i, 0, 0)),
            ],
            scratch_shapes=[
                pltpu.VMEM((bm, 1), jnp.float32),              # running row maxima
            ],
        ),
        compiler_params=pltpu.CompilerParams(
            # no state carried across row blocks -> i is megacore-shardable
            dimension_semantics=("parallel", "arbitrary"),
            vmem_limit_bytes=vmem_limit,
        ),
        cost_estimate=pl.CostEstimate(
            flops=6 * n * n,
            transcendentals=0,
            bytes_accessed=2 * n * n * itemsize + 4 * ni * (n + 1),
        ),
    )(scores, scores_anchor)

    # O(ni + N) epilogue + O(N) positive term in plain JAX.
    cost_neg = jnp.sum(row_part) + jnp.sum(jnp.max(col_part, axis=0))
    diag_s = jnp.diagonal(scores).astype(jnp.float32)
    diag_a = jnp.diagonal(scores_anchor).astype(jnp.float32)
    cost_pos = jnp.sum(jnp.maximum(margin_pos + diag_a - diag_s, 0.0))
    return 2.0 * cost_pos + cost_neg


def _reference(scores, scores_anchor, margin=0.0, beta=1.0, gamma=0.5):
    """Pure-JAX mirror of the PyTorch module."""
    m = float(margin) * float(beta)
    mp = m * float(gamma)
    mn = m * (1.0 - float(gamma))
    s = scores.astype(jnp.float32)
    a = scores_anchor.astype(jnp.float32)
    n = s.shape[0]
    pos = jnp.diag(s).reshape(n, 1)
    pos_a = jnp.diag(a).reshape(n, 1)
    cost_pos = jnp.sum(jnp.maximum(mp + pos_a - pos, 0.0))
    cost_neg = jnp.maximum(mn + s - a, 0.0)
    eye = jnp.eye(n, dtype=bool)
    cost_neg = jnp.where(eye, 0.0, cost_neg)
    cost_neg = jnp.sum(jnp.max(cost_neg, axis=1)) + jnp.sum(jnp.max(cost_neg, axis=0))
    return cost_pos * 2.0 + cost_neg


if __name__ == "__main__":
    key = jax.random.PRNGKey(0)
    k1, k2, k3, k4 = jax.random.split(key, 4)

    # Multi-tile case: (256, 256) with (128, 128) tiles -> 2x2 grid; exercises
    # the diag-tile gating (on/off-diagonal tiles), row-max scratch reset, the
    # per-row-block partial outputs and the col-slice writes.
    N = 256
    scores = jax.random.normal(k1, (N, N), dtype=jnp.float32)
    anchor = jax.random.normal(k2, (N, N), dtype=jnp.float32)

    ref = _reference(scores, anchor, margin=0.2, beta=1.0, gamma=0.5)

    loss = boostabs_loss(scores, anchor, margin=0.2, beta=1.0, gamma=0.5,
                         block_m=128, block_n=128)
    loss = jax.block_until_ready(loss)
    assert jnp.allclose(loss, ref, rtol=1e-5, atol=1e-2), (loss, ref)

    # Auto-picked tiles (single 256x256 block at this size): nj == 1 path.
    loss_auto = boostabs_loss(scores, anchor, margin=0.2, beta=1.0, gamma=0.5)
    loss_auto = jax.block_until_ready(loss_auto)
    assert jnp.allclose(loss_auto, ref, rtol=1e-5, atol=1e-2), (loss_auto, ref)

    # Small non-128-aligned case (block == full matrix), default margins.
    n_small = 8
    s_small = jax.random.normal(k3, (n_small, n_small), dtype=jnp.float32)
    a_small = jax.random.normal(k4, (n_small, n_small), dtype=jnp.float32)
    loss_small = boostabs_loss(s_small, a_small, margin=0.0)
    loss_small = jax.block_until_ready(loss_small)
    ref_small = _reference(s_small, a_small, margin=0.0)
    assert jnp.allclose(loss_small, ref_small, rtol=1e-5, atol=1e-4), (
        loss_small, ref_small)

    print("KERNEL_OK")
</pallas_src>

<mosaic_0001>
module attributes {stable_mosaic.version = 11 : i64} {
  func.func @_boostabs_kernel(%arg0: i32, %arg1: i32, %arg2: memref<128x128xf32, #tpu.memory_space<vmem>>, %arg3: memref<128x128xf32, #tpu.memory_space<vmem>>, %arg4: memref<1x1x1xf32, #tpu.memory_space<vmem>>, %arg5: memref<1x1x256xf32, #tpu.memory_space<vmem>>, %arg6: memref<128x1xf32, #tpu.memory_space<vmem>>) attributes {dimension_semantics = [#tpu.dimension_semantics<parallel>, #tpu.dimension_semantics<arbitrary>], iteration_bounds = array<i64: 2, 2>, scalar_prefetch = 0 : i64, scratch_operands = 1 : i64, tpu.core_type = #tpu.core_type<tc>, window_params = [{transform_indices = @transform_0, window_bounds = array<i64: 128, 128>}, {transform_indices = @transform_1, window_bounds = array<i64: 128, 128>}, {transform_indices = @transform_2, window_bounds = array<i64: 1, 1, 1>}, {transform_indices = @transform_3, window_bounds = array<i64: 1, 1, 256>}]} {
    %c0 = arith.constant 0 : index
    %c0_0 = arith.constant 0 : index
    %0 = vector.load %arg2[%c0, %c0_0] : memref<128x128xf32, #tpu.memory_space<vmem>>, vector<128x128xf32>
    %c0_1 = arith.constant 0 : index
    %c0_2 = arith.constant 0 : index
    %1 = vector.load %arg3[%c0_1, %c0_2] : memref<128x128xf32, #tpu.memory_space<vmem>>, vector<128x128xf32>
    %cst = arith.constant 1.000000e-01 : f32
    %2 = vector.broadcast %cst : f32 to vector<128x128xf32>
    %3 = arith.addf %2, %0 : vector<128x128xf32>
    %4 = arith.subf %3, %1 : vector<128x128xf32>
    %cst_3 = arith.constant 0.000000e+00 : f32
    %5 = vector.broadcast %cst_3 : f32 to vector<128x128xf32>
    %6 = arith.maximumf %4, %5 : vector<128x128xf32>
    %c0_i32 = arith.constant 0 : i32
    %7 = arith.cmpi eq, %arg1, %c0_i32 : i32
    %8 = arith.extui %7 : i1 to i32
    %c0_i32_4 = arith.constant 0 : i32
    %9 = arith.cmpi ne, %8, %c0_i32_4 : i32
    scf.if %9 {
      %cst_13 = arith.constant 0.000000e+00 : f32
      %28 = vector.broadcast %cst_13 : f32 to vector<128x1xf32>
      %c0_14 = arith.constant 0 : index
      %c0_15 = arith.constant 0 : index
      %29 = vector.load %arg6[%c0_14, %c0_15] : memref<128x1xf32, #tpu.memory_space<vmem>>, vector<128x1xf32>
      tpu.vector_store %arg6[%c0_14, %c0_15], %28 {strides = array<i32>} : memref<128x1xf32, #tpu.memory_space<vmem>>, vector<128x1xf32>,
    } else {
    }
    %c128_i32 = arith.constant 128 : i32
    %10 = arith.muli %arg0, %c128_i32 : i32
    %c128_i32_5 = arith.constant 128 : i32
    %11 = arith.muli %arg1, %c128_i32_5 : i32
    %12 = tpu.assume_multiple %11, 128 : i32
    %c128_i32_6 = arith.constant 128 : i32
    %13 = arith.muli %arg1, %c128_i32_6 : i32
    %c128_i32_7 = arith.constant 128 : i32
    %14 = arith.addi %13, %c128_i32_7 : i32
    %15 = arith.cmpi slt, %10, %14 : i32
    %c128_i32_8 = arith.constant 128 : i32
    %16 = arith.muli %arg1, %c128_i32_8 : i32
    %c128_i32_9 = arith.constant 128 : i32
    %17 = arith.addi %10, %c128_i32_9 : i32
    %18 = arith.cmpi slt, %16, %17 : i32
    %19 = arith.andi %15, %18 : i1
    %20 = arith.extui %19 : i1 to i32
    %c0_i32_10 = arith.constant 0 : i32
    %21 = arith.cmpi ne, %20, %c0_i32_10 : i32
    scf.if %21 {
      %28 = tpu.iota {dimensions = array<i32: 0>} : vector<128x128xi32>
      %29 = vector.broadcast %10 : i32 to vector<128x128xi32>
      %30 = arith.addi %29, %28 : vector<128x128xi32>
      %c128_i32_13 = arith.constant 128 : i32
      %31 = arith.muli %arg1, %c128_i32_13 : i32
      %32 = tpu.iota {dimensions = array<i32: 1>} : vector<128x128xi32>
      %33 = vector.broadcast %31 : i32 to vector<128x128xi32>
      %34 = arith.addi %33, %32 : vector<128x128xi32>
      %35 = arith.cmpi eq, %30, %34 : vector<128x128xi32>
      %cst_14 = arith.constant 0.000000e+00 : f32
      %36 = vector.broadcast %cst_14 : f32 to vector<128x128xf32>
      %37 = arith.select %35, %36, %6 : vector<128x128xi1>, vector<128x128xf32>
      %c0_15 = arith.constant 0 : index
      %c0_16 = arith.constant 0 : index
      %38 = vector.load %arg6[%c0_15, %c0_16] : memref<128x1xf32, #tpu.memory_space<vmem>>, vector<128x1xf32>
      %cst_17 = arith.constant dense<0xFF800000> : vector<128xf32>
      %39 = vector.multi_reduction <maximumf>, %37, %cst_17 [1] : vector<128x128xf32> to vector<128xf32>
      %40 = vector.shape_cast %39 : vector<128xf32> to vector<128x1xf32>
      %41 = arith.maximumf %38, %40 : vector<128x1xf32>
      %c0_18 = arith.constant 0 : index
      %c0_19 = arith.constant 0 : index
      %42 = vector.load %arg6[%c0_18, %c0_19] : memref<128x1xf32, #tpu.memory_space<vmem>>, vector<128x1xf32>
      tpu.vector_store %arg6[%c0_18, %c0_19], %41 {strides = array<i32>} : memref<128x1xf32, #tpu.memory_space<vmem>>, vector<128x1xf32>,
      %cst_20 = arith.constant dense<0xFF800000> : vector<128xf32>
      %43 = vector.multi_reduction <maximumf>, %37, %cst_20 [0] : vector<128x128xf32> to vector<128xf32>
      %44 = vector.shape_cast %43 : vector<128xf32> to vector<1x128xf32>
      %45 = vector.shape_cast %44 : vector<1x128xf32> to vector<1x1x128xf32>
      %c0_21 = arith.constant 0 : index
      %c0_22 = arith.constant 0 : index
      %46 = arith.index_cast %12 : i32 to index
      %47 = vector.load %arg5[%c0_21, %c0_22, %46] : memref<1x1x256xf32, #tpu.memory_space<vmem>>, vector<1x1x128xf32>
      tpu.vector_store %arg5[%c0_21, %c0_22, %46], %45 {strides = array<i32>} : memref<1x1x256xf32, #tpu.memory_space<vmem>>, vector<1x1x128xf32>,
    } else {
    }
    %true = arith.constant true
    %22 = arith.xori %19, %true : i1
    %23 = arith.extui %22 : i1 to i32
    %c0_i32_11 = arith.constant 0 : i32
    %24 = arith.cmpi ne, %23, %c0_i32_11 : i32
    scf.if %24 {
      %c0_13 = arith.constant 0 : index
      %c0_14 = arith.constant 0 : index
      %28 = vector.load %arg6[%c0_13, %c0_14] : memref<128x1xf32, #tpu.memory_space<vmem>>, vector<128x1xf32>
      %cst_15 = arith.constant dense<0xFF800000> : vector<128xf32>
      %29 = vector.multi_reduction <maximumf>, %6, %cst_15 [1] : vector<128x128xf32> to vector<128xf32>
      %30 = vector.shape_cast %29 : vector<128xf32> to vector<128x1xf32>
      %31 = arith.maximumf %28, %30 : vector<128x1xf32>
      %c0_16 = arith.constant 0 : index
      %c0_17 = arith.constant 0 : index
      %32 = vector.load %arg6[%c0_16, %c0_17] : memref<128x1xf32, #tpu.memory_space<vmem>>, vector<128x1xf32>
      tpu.vector_store %arg6[%c0_16, %c0_17], %31 {strides = array<i32>} : memref<128x1xf32, #tpu.memory_space<vmem>>, vector<128x1xf32>,
      %cst_18 = arith.constant dense<0xFF800000> : vector<128xf32>
      %33 = vector.multi_reduction <maximumf>, %6, %cst_18 [0] : vector<128x128xf32> to vector<128xf32>
      %34 = vector.shape_cast %33 : vector<128xf32> to vector<1x128xf32>
      %35 = vector.shape_cast %34 : vector<1x128xf32> to vector<1x1x128xf32>
      %c0_19 = arith.constant 0 : index
      %c0_20 = arith.constant 0 : index
      %36 = arith.index_cast %12 : i32 to index
      %37 = vector.load %arg5[%c0_19, %c0_20, %36] : memref<1x1x256xf32, #tpu.memory_space<vmem>>, vector<1x1x128xf32>
      tpu.vector_store %arg5[%c0_19, %c0_20, %36], %35 {strides = array<i32>} : memref<1x1x256xf32, #tpu.memory_space<vmem>>, vector<1x1x128xf32>,
    } else {
    }
    %c1_i32 = arith.constant 1 : i32
    %25 = arith.cmpi eq, %arg1, %c1_i32 : i32
    %26 = arith.extui %25 : i1 to i32
    %c0_i32_12 = arith.constant 0 : i32
    %27 = arith.cmpi ne, %26, %c0_i32_12 : i32
    scf.if %27 {
      %c0_13 = arith.constant 0 : index
      %c0_14 = arith.constant 0 : index
      %28 = vector.load %arg6[%c0_13, %c0_14] : memref<128x1xf32, #tpu.memory_space<vmem>>, vector<128x1xf32>
      %29 = vector.shape_cast %28 : vector<128x1xf32> to vector<1x128x1xf32>
      %cst_15 = arith.constant dense<0.000000e+00> : vector<1xf32>
      %30 = vector.multi_reduction <add>, %29, %cst_15 [1, 2] : vector<1x128x1xf32> to vector<1xf32>
      %31 = vector.shape_cast %30 : vector<1xf32> to vector<1x1x1xf32>
      %32 = vector.extract %31[0, 0, 0] : f32 from vector<1x1x1xf32>
      %33 = vector.broadcast %32 : f32 to vector<1x1x1xf32>
      %c0_16 = arith.constant 0 : index
      %c0_17 = arith.constant 0 : index
      %c0_18 = arith.constant 0 : index
      %34 = vector.load %arg4[%c0_16, %c0_17, %c0_18] : memref<1x1x1xf32, #tpu.memory_space<vmem>>, vector<1x1x1xf32>
      tpu.vector_store %arg4[%c0_16, %c0_17, %c0_18], %33 {strides = array<i32>} : memref<1x1x1xf32, #tpu.memory_space<vmem>>, vector<1x1x1xf32>,
    } else {
    }
    return
  }
  func.func @transform_0(%arg0: i32, %arg1: i32) -> (i32, i32) {
    %c0_i32 = arith.constant 0 : i32
    return %arg0, %arg1 : i32, i32
  }
  func.func @transform_1(%arg0: i32, %arg1: i32) -> (i32, i32) {
    %c0_i32 = arith.constant 0 : i32
    return %arg0, %arg1 : i32, i32
  }
  func.func @transform_2(%arg0: i32, %arg1: i32) -> (i32, i32, i32) {
    %c0_i32 = arith.constant 0 : i32
    %c0_i32_0 = arith.constant 0 : i32
    %c0_i32_1 = arith.constant 0 : i32
    return %arg0, %c0_i32, %c0_i32_0 : i32, i32, i32
  }
  func.func @transform_3(%arg0: i32, %arg1: i32) -> (i32, i32, i32) {
    %c0_i32 = arith.constant 0 : i32
    %c0_i32_0 = arith.constant 0 : i32
    %c0_i32_1 = arith.constant 0 : i32
    return %arg0, %c0_i32, %c0_i32_0 : i32, i32, i32
  }
}

</mosaic_0001>

<llo_original>
// kernel: tpu_custom_call.1
$region0: #{tpu_custom_call.1}
  #allocation0 [shape = 'u32[]', space=smem, size = 0x4, offset = 0x4, fixed_abs, tag = 'smem constant byte address 0x4 - core index']
  #allocation1 [shape = 'u32[144,128]{1,0:T(1,128)}', space=vmem, size = 0x12000, scoped, tag = 'internal scratch']
  #allocation2 [shape = 'f32[128,1]{1,0:T(8,128)}', space=vmem, size = 0x10000, scoped, tag = 'scratch operand']
  %s0 = inlined_call_operand.hbm [shape: f32[256,256], index: 0, kind: input, shape index: {}]
  %s1 = inlined_call_operand.hbm [shape: f32[256,256], index: 1, kind: input, shape index: {}]
  %s2 = inlined_call_operand.vmem [shape: f32[2,1,1], index: 2, kind: output, shape index: {0}]
  %s3 = inlined_call_operand.hbm [shape: f32[2,1,256], index: 3, kind: output, shape index: {1}]
  %4 = xla_tuple %s2, %s3
  %s5 = sld [smem:[#allocation0]]
  $region73: #{tpu_custom_call.1} parent=0
    _
  %s7 = ssub.s32 1, %s5
  %s8 = scalar_select 0, %s7, %s5
  $region1: #{tpu_custom_call.1} parent=0
    #allocation3 [shape = 'u8[131072]{0}', space=vmem, size = 0x20000, scoped, tag = 'input window, operand 0']
    #allocation4 [shape = 's32[2]{0}', space=sflag, size = 0x8, scoped, tag = 'scoped memory for tpu_custom_call.1']
    #allocation5 [shape = 's32[2]{0}', space=sflag, size = 0x8, scoped, tag = 'scoped memory for tpu_custom_call.1']
    #allocation6 [shape = 'u8[131072]{0}', space=vmem, size = 0x20000, scoped, tag = 'input window, operand 1']
    #allocation7 [shape = 's32[2]{0}', space=sflag, size = 0x8, scoped, tag = 'scoped memory for tpu_custom_call.1']
    #allocation8 [shape = 'u8[2048]{0}', space=vmem, size = 0x800, scoped, tag = 'output window, operand 1']
    %9 = vsyncpa [#allocation4], 0
    %s10 = scalar_lea.sflag [#allocation4], 1
    %11 = vsyncpa %s10, 0
    %12 = vsyncpa [#allocation7], 0
    %s13 = scalar_lea.sflag [#allocation7], 1
    %14 = vsyncpa %s13, 0
    %15 = vsyncpa [#allocation5], 0
    %s16 = scalar_lea.sflag [#allocation5], 1
    %17 = vsyncpa %s16, 0
    loop: start=0, step=1, limit=6
    $region2: #{tpu_custom_call.1} parent=1 // loop_pre_header
      _
    $region3: #{tpu_custom_call.1} parent=1 // loop_header
      %s19 = sphi 0, %s23
      %p20 = scmp.ge.s32.totalorder %s19, 6
      %s26 = sphi 0, %s38
      %s27 = sphi 0, %s34
      %s28 = sphi 0, %s26
      %s29 = sphi 0, %s27
      %s30 = sphi 0, %s28
      %s31 = sphi 0, %s29
      %s43 = sphi 0, %s45
      %s46 = sphi 0, %s43
      %s47 = sphi 0, %s46
      %s63 = sphi 0, %s47
      %s71 = sphi 0, %s73
      %s74 = sphi 0, %s71
      %s75 = sphi 0, %s74
      %s91 = sphi 0, %s75
      %s97 = sphi 0, %s99
      %s100 = sphi 0, %s97
      %s101 = sphi 0, %s100
      %s117 = sphi 0, %s101
      %s123 = sphi 0, %s125
      %s126 = sphi 0, %s123
      %s127 = sphi 0, %s126
      %s143 = sphi 0, %s127
    $region4: #{tpu_custom_call.1} parent=1 // loop_header_branch
      %22 = sbr.rel (%p20) target = $region8
    $region5: #{tpu_custom_call.1} parent=1 // loop_body
      %s24 = ssub.s32 %s19, 1
      %s25 = ssub.s32 %s19, 2
      %s32 = sadd.s32 1, %s27
      %p33 = scmp.ge.s32.totalorder %s32, 2
      %s34 = scalar_select %p33, 0, %s32
      %s35 = sadd.s32 1, %s26
      %s36 = scalar_select %p33, %s35, %s26
      %p37 = scmp.ge.s32.totalorder %s36, 2
      %s38 = scalar_select %p37, 0, %s36
      %s39 = ssub.s32 %s26, %s38
      %s40 = ssub.s32 %s27, %s34
      %s41 = sor.u32 %s39, %s40
      %p42 = scmp.eq.s32.totalorder %s41, 0
      %s44 = sadd.s32 %s43, 1
      %s45 = scalar_select %p42, %s43, %s44
      %p48 = pneg %p42
      %p49 = scmp.eq.s32.totalorder %s19, 3
      %p50 = por %p48, %p49
      %p51 = scmp.ne.s32.totalorder %s43, %s46
      %p52 = scmp.eq.s32.totalorder %s19, 0
      %p53 = por %p51, %p52
      %p54 = scmp.ne.s32.totalorder %s43, %s46
      %p55 = scmp.eq.s32.totalorder %s24, 3
      %p56 = por %p54, %p55
      %p57 = scmp.ne.s32.totalorder %s46, %s47
      %p58 = scmp.eq.s32.totalorder %s24, 0
      %p59 = por %p57, %p58
      %p60 = scmp.ne.s32.totalorder %s46, %s47
      %p61 = scmp.eq.s32.totalorder %s25, 3
      %p62 = por %p60, %p61
      %p64 = scmp.ne.s32.totalorder %s47, %s63
      %p65 = scmp.eq.s32.totalorder %s25, 0
      %p66 = por %p64, %p65
      %s67 = ssub.s32 %s26, %s38
      %s68 = ssub.s32 %s27, %s34
      %s69 = sor.u32 %s67, %s68
      %p70 = scmp.eq.s32.totalorder %s69, 0
      %s72 = sadd.s32 %s71, 1
      %s73 = scalar_select %p70, %s71, %s72
      %p76 = pneg %p70
      %p77 = scmp.eq.s32.totalorder %s19, 3
      %p78 = por %p76, %p77
      %p79 = scmp.ne.s32.totalorder %s71, %s74
      %p80 = scmp.eq.s32.totalorder %s19, 0
      %p81 = por %p79, %p80
      %p82 = scmp.ne.s32.totalorder %s71, %s74
      %p83 = scmp.eq.s32.totalorder %s24, 3
      %p84 = por %p82, %p83
      %p85 = scmp.ne.s32.totalorder %s74, %s75
      %p86 = scmp.eq.s32.totalorder %s24, 0
      %p87 = por %p85, %p86
      %p88 = scmp.ne.s32.totalorder %s74, %s75
      %p89 = scmp.eq.s32.totalorder %s25, 3
      %p90 = por %p88, %p89
      %p92 = scmp.ne.s32.totalorder %s75, %s91
      %p93 = scmp.eq.s32.totalorder %s25, 0
      %p94 = por %p92, %p93
      %s95 = ssub.s32 %s26, %s38
      %p96 = scmp.eq.s32.totalorder %s95, 0
      %s98 = sadd.s32 %s97, 1
      %s99 = scalar_select %p96, %s97, %s98
      %p102 = pneg %p96
      %p103 = scmp.eq.s32.totalorder %s19, 3
      %p104 = por %p102, %p103
      %p105 = scmp.ne.s32.totalorder %s97, %s100
      %p106 = scmp.eq.s32.totalorder %s19, 0
      %p107 = por %p105, %p106
      %p108 = scmp.ne.s32.totalorder %s97, %s100
      %p109 = scmp.eq.s32.totalorder %s24, 3
      %p110 = por %p108, %p109
      %p111 = scmp.ne.s32.totalorder %s100, %s101
      %p112 = scmp.eq.s32.totalorder %s24, 0
      %p113 = por %p111, %p112
      %p114 = scmp.ne.s32.totalorder %s100, %s101
      %p115 = scmp.eq.s32.totalorder %s25, 3
      %p116 = por %p114, %p115
      %p118 = scmp.ne.s32.totalorder %s101, %s117
      %p119 = scmp.eq.s32.totalorder %s25, 0
      %p120 = por %p118, %p119
      %s121 = ssub.s32 %s26, %s38
      %p122 = scmp.eq.s32.totalorder %s121, 0
      %s124 = sadd.s32 %s123, 1
      %s125 = scalar_select %p122, %s123, %s124
      %p128 = pneg %p122
      %p129 = scmp.eq.s32.totalorder %s19, 3
      %p130 = por %p128, %p129
      %p131 = scmp.ne.s32.totalorder %s123, %s126
      %p132 = scmp.eq.s32.totalorder %s19, 0
      %p133 = por %p131, %p132
      %p134 = scmp.ne.s32.totalorder %s123, %s126
      %p135 = scmp.eq.s32.totalorder %s24, 3
      %p136 = por %p134, %p135
      %p137 = scmp.ne.s32.totalorder %s126, %s127
      %p138 = scmp.eq.s32.totalorder %s24, 0
      %p139 = por %p137, %p138
      %p140 = scmp.ne.s32.totalorder %s126, %s127
      %p141 = scmp.eq.s32.totalorder %s25, 3
      %p142 = por %p140, %p141
      %p144 = scmp.ne.s32.totalorder %s127, %s143
      %p145 = scmp.eq.s32.totalorder %s25, 0
      %p146 = por %p144, %p145
      %p147 = scmp.le.s32.totalorder 1, %s19
      %p148 = scmp.lt.s32.totalorder %s19, 5
      %p149 = pnand %p147, %p148
      %p150 = pneg %p149
      // Predicated region
      $region9: #{tpu_custom_call.1} parent=5 // pred_check
        _
      $region10: #{tpu_custom_call.1} parent=5 // pred_check_branch
        %152 = sbr.rel (%p149) target = $region12
      $region11: #{tpu_custom_call.1} parent=5 // pred_region
        %s153 = ssub.s32 %s19, 1
      $region12: #{tpu_custom_call.1} parent=5 // pred_fallthru
        _
      %p154 = scmp.lt.s32.totalorder %s19, 4
      // Predicated region
      $region13: #{tpu_custom_call.1} parent=5 // pred_check
        %p155 = pneg %p154
      $region14: #{tpu_custom_call.1} parent=5 // pred_check_branch
        %157 = sbr.rel (%p155) target = $region16
      $region15: #{tpu_custom_call.1} parent=5 // pred_region
        // Predicated region
        $region17: #{tpu_custom_call.1} parent=15 // pred_check
          %p158 = pneg %p53
        $region18: #{tpu_custom_call.1} parent=15 // pred_check_branch
          %160 = sbr.rel (%p158) target = $region20
        $region19: #{tpu_custom_call.1} parent=15 // pred_region
          %s161 = sand.u32 %s43, 1
          %s162 = scalar_lea.sflag [#allocation4], %s161
          %s163 = sand.u32 %s43, 1
          %s164 = smul.addr %s163, 128
          %s165 = scalar_lea.vmem [#allocation3], %s164
          %s166 = smul.u32 16, %s26
          %s168 = ssub.s32 2048, 2048
          %169 = vsyncadd %s162, %s168
          %s170 = smul.addr %s166, 2
          %s171 = sadd.s32 %s27, %s170
          %s172 = smul.addr %s171, 128
          %s173 = scalar_lea.hbm %s0, %s172
          %s174 = sshll.u32 %s165, 4
          %s175 = int_to_ptr.vmem [resolvable:$true] %s174
          %180 = dma.hbm_to_vmem [thread:$0]  %s173, 2048, %s175, %s162, 256, 128, 8
        $region20: #{tpu_custom_call.1} parent=15 // pred_fallthru
          _
        // Predicated region
        $region21: #{tpu_custom_call.1} parent=15 // pred_check
          %p181 = pneg %p81
        $region22: #{tpu_custom_call.1} parent=15 // pred_check_branch
          %183 = sbr.rel (%p181) target = $region24
        $region23: #{tpu_custom_call.1} parent=15 // pred_region
          %s184 = sand.u32 %s71, 1
          %s185 = scalar_lea.sflag [#allocation7], %s184
          %s186 = sand.u32 %s71, 1
          %s187 = smul.addr %s186, 128
          %s188 = scalar_lea.vmem [#allocation6], %s187
          %s189 = smul.u32 16, %s26
          %s191 = ssub.s32 2048, 2048
          %192 = vsyncadd %s185, %s191
          %s193 = smul.addr %s189, 2
          %s194 = sadd.s32 %s27, %s193
          %s195 = smul.addr %s194, 128
          %s196 = scalar_lea.hbm %s1, %s195
          %s197 = sshll.u32 %s188, 4
          %s198 = int_to_ptr.vmem [resolvable:$true] %s197
          %203 = dma.hbm_to_vmem [thread:$0]  %s196, 2048, %s198, %s185, 256, 128, 8
        $region24: #{tpu_custom_call.1} parent=15 // pred_fallthru
          _
      $region16: #{tpu_custom_call.1} parent=5 // pred_fallthru
        _
      %p204 = scmp.le.s32.totalorder 1, %s19
      %p205 = scmp.lt.s32.totalorder %s19, 5
      %p206 = pnand %p204, %p205
      %p207 = pneg %p206
      // Predicated region
      $region25: #{tpu_custom_call.1} parent=5 // pred_check
        _
      $region26: #{tpu_custom_call.1} parent=5 // pred_check_branch
        %209 = sbr.rel (%p206) target = $region28
      $region27: #{tpu_custom_call.1} parent=5 // pred_region
        %s210 = ssub.s32 %s19, 1
        %s211 = sand.u32 %s46, 1
        %s212 = scalar_lea.sflag [#allocation4], %s211
        %s213 = sand.u32 %s46, 1
        %s214 = smul.addr %s213, 128
        %s215 = scalar_lea.vmem [#allocation3], %s214
        // Predicated region
        $region29: #{tpu_custom_call.1} parent=27 // pred_check
          %p216 = pneg %p59
        $region30: #{tpu_custom_call.1} parent=27 // pred_check_branch
          %218 = sbr.rel (%p216) target = $region32
        $region31: #{tpu_custom_call.1} parent=27 // pred_region
          %219 = dma.done %s212, 2048
        $region32: #{tpu_custom_call.1} parent=27 // pred_fallthru
          _
        %s220 = sand.u32 %s74, 1
        %s221 = scalar_lea.sflag [#allocation7], %s220
        %s222 = sand.u32 %s74, 1
        %s223 = smul.addr %s222, 128
        %s224 = scalar_lea.vmem [#allocation6], %s223
        // Predicated region
        $region33: #{tpu_custom_call.1} parent=27 // pred_check
          %p225 = pneg %p87
        $region34: #{tpu_custom_call.1} parent=27 // pred_check_branch
          %227 = sbr.rel (%p225) target = $region36
        $region35: #{tpu_custom_call.1} parent=27 // pred_region
          %228 = dma.done %s221, 2048
        $region36: #{tpu_custom_call.1} parent=27 // pred_fallthru
          _
        %s229 = sand.u32 %s46, 1
        %s230 = scalar_lea.sflag [#allocation4], %s229
        %s231 = sand.u32 %s46, 1
        %s232 = smul.addr %s231, 128
        %s233 = scalar_lea.vmem [#allocation3], %s232
        %p234 = pneg %p59
        %p235 = pneg %p56
        %s236 = sand.u32 %s74, 1
        %s237 = scalar_lea.sflag [#allocation7], %s236
        %s238 = sand.u32 %s74, 1
        %s239 = smul.addr %s238, 128
        %s240 = scalar_lea.vmem [#allocation6], %s239
        %p241 = pneg %p87
        %p242 = pneg %p84
        %p243 = pneg %p113
        %p244 = pneg %p110
        %p245 = scmp.lt.s32.totalorder %s28, 1
        %s246 = scalar_select %p245, %s28, 1
        %s247 = scalar_lea.vmem %s2, %s246
        %p248 = pneg %p139
        %p249 = pneg %p136
        %s250 = sand.u32 %s126, 1
        %s251 = scalar_lea.sflag [#allocation5], %s250
        %s252 = sand.u32 %s126, 1
        %s253 = smul.addr %s252, 2
        %s254 = scalar_lea.vmem [#allocation8], %s253
        %s255 = smul.u32 16, %s28
        %s256 = smul.u32 16, %s28
        %p257 = scmp.lt.s32.totalorder %s28, 1
        %s258 = scalar_select %p257, %s28, 1
        %s259 = scalar_lea.vmem %s2, %s258
        %v260 = vld [vmem:[%s215] sm:$0xff]
        %v261 = vld [vmem:[%s215 + $0x8] sm:$0xff]
        %v262 = vld [vmem:[%s215 + $0x10] sm:$0xff]
        %v263 = vld [vmem:[%s215 + $0x18] sm:$0xff]
        %v264 = vld [vmem:[%s215 + $0x20] sm:$0xff]
        %v265 = vld [vmem:[%s215 + $0x28] sm:$0xff]
        %v266 = vld [vmem:[%s215 + $0x30] sm:$0xff]
        %v267 = vld [vmem:[%s215 + $0x38] sm:$0xff]
        %v268 = vld [vmem:[%s215 + $0x40] sm:$0xff]
        %v269 = vld [vmem:[%s215 + $0x48] sm:$0xff]
        %v270 = vld [vmem:[%s215 + $0x50] sm:$0xff]
        %v271 = vld [vmem:[%s215 + $0x58] sm:$0xff]
        %v272 = vld [vmem:[%s215 + $0x60] sm:$0xff]
        %v273 = vld [vmem:[%s215 + $0x68] sm:$0xff]
        %v274 = vld [vmem:[%s215 + $0x70] sm:$0xff]
        %v275 = vld [vmem:[%s215 + $0x78] sm:$0xff]
        %v276 = vld [vmem:[%s224] sm:$0xff]
        %v277 = vld [vmem:[%s224 + $0x8] sm:$0xff]
        %v278 = vld [vmem:[%s224 + $0x10] sm:$0xff]
        %v279 = vld [vmem:[%s224 + $0x18] sm:$0xff]
        %v280 = vld [vmem:[%s224 + $0x20] sm:$0xff]
        %v281 = vld [vmem:[%s224 + $0x28] sm:$0xff]
        %v282 = vld [vmem:[%s224 + $0x30] sm:$0xff]
        %v283 = vld [vmem:[%s224 + $0x38] sm:$0xff]
        %v284 = vld [vmem:[%s224 + $0x40] sm:$0xff]
        %v285 = vld [vmem:[%s224 + $0x48] sm:$0xff]
        %v286 = vld [vmem:[%s224 + $0x50] sm:$0xff]
        %v287 = vld [vmem:[%s224 + $0x58] sm:$0xff]
        %v288 = vld [vmem:[%s224 + $0x60] sm:$0xff]
        %v289 = vld [vmem:[%s224 + $0x68] sm:$0xff]
        %v290 = vld [vmem:[%s224 + $0x70] sm:$0xff]
        %v291 = vld [vmem:[%s224 + $0x78] sm:$0xff]
        %v292 = vadd.f32 %v260, 0.1
        %v293 = vadd.f32 %v261, 0.1
        %v294 = vadd.f32 %v262, 0.1
        %v295 = vadd.f32 %v263, 0.1
        %v296 = vadd.f32 %v264, 0.1
        %v297 = vadd.f32 %v265, 0.1
        %v298 = vadd.f32 %v266, 0.1
        %v299 = vadd.f32 %v267, 0.1
        %v300 = vadd.f32 %v268, 0.1
        %v301 = vadd.f32 %v269, 0.1
        %v302 = vadd.f32 %v270, 0.1
        %v303 = vadd.f32 %v271, 0.1
        %v304 = vadd.f32 %v272, 0.1
        %v305 = vadd.f32 %v273, 0.1
        %v306 = vadd.f32 %v274, 0.1
        %v307 = vadd.f32 %v275, 0.1
        %v308 = vsub.f32 %v292, %v276
        %v309 = vsub.f32 %v293, %v277
        %v310 = vsub.f32 %v294, %v278
        %v311 = vsub.f32 %v295, %v279
        %v312 = vsub.f32 %v296, %v280
        %v313 = vsub.f32 %v297, %v281
        %v314 = vsub.f32 %v298, %v282
        %v315 = vsub.f32 %v299, %v283
        %v316 = vsub.f32 %v300, %v284
        %v317 = vsub.f32 %v301, %v285
        %v318 = vsub.f32 %v302, %v286
        %v319 = vsub.f32 %v303, %v287
        %v320 = vsub.f32 %v304, %v288
        %v321 = vsub.f32 %v305, %v289
        %v322 = vsub.f32 %v306, %v290
        %v323 = vsub.f32 %v307, %v291
        %v324 = vmax.f32 %v308, 0.0
        %v325 = vmax.f32 %v309, 0.0
        %v326 = vmax.f32 %v310, 0.0
        %v327 = vmax.f32 %v311, 0.0
        %v328 = vmax.f32 %v312, 0.0
        %v329 = vmax.f32 %v313, 0.0
        %v330 = vmax.f32 %v314, 0.0
        %v331 = vmax.f32 %v315, 0.0
        %v332 = vmax.f32 %v316, 0.0
        %v333 = vmax.f32 %v317, 0.0
        %v334 = vmax.f32 %v318, 0.0
        %v335 = vmax.f32 %v319, 0.0
        %v336 = vmax.f32 %v320, 0.0
        %v337 = vmax.f32 %v321, 0.0
        %v338 = vmax.f32 %v322, 0.0
        %v339 = vmax.f32 %v323, 0.0
        %p340 = scmp.eq.s32.totalorder %s29, 0
        // Predicated region
        $region37: #{tpu_custom_call.1} parent=27 // pred_check
          %p341 = pneg %p340
        $region38: #{tpu_custom_call.1} parent=27 // pred_check_branch
          %343 = sbr.rel (%p341) target = $region40
        $region39: #{tpu_custom_call.1} parent=27 // pred_region
          %vm344 = vcmask 7168
          %345 = vst.msk [vmem:[#allocation2] sm:$0xff] %vm344, 0.0
          %346 = vst.msk [vmem:[#allocation2 + $0x8] sm:$0xff] %vm344, 0.0
          %347 = vst.msk [vmem:[#allocation2 + $0x10] sm:$0xff] %vm344, 0.0
          %348 = vst.msk [vmem:[#allocation2 + $0x18] sm:$0xff] %vm344, 0.0
          %349 = vst.msk [vmem:[#allocation2 + $0x20] sm:$0xff] %vm344, 0.0
          %350 = vst.msk [vmem:[#allocation2 + $0x28] sm:$0xff] %vm344, 0.0
          %351 = vst.msk [vmem:[#allocation2 + $0x30] sm:$0xff] %vm344, 0.0
          %352 = vst.msk [vmem:[#allocation2 + $0x38] sm:$0xff] %vm344, 0.0
          %353 = vst.msk [vmem:[#allocation2 + $0x40] sm:$0xff] %vm344, 0.0
          %354 = vst.msk [vmem:[#allocation2 + $0x48] sm:$0xff] %vm344, 0.0
          %355 = vst.msk [vmem:[#allocation2 + $0x50] sm:$0xff] %vm344, 0.0
          %356 = vst.msk [vmem:[#allocation2 + $0x58] sm:$0xff] %vm344, 0.0
          %357 = vst.msk [vmem:[#allocation2 + $0x60] sm:$0xff] %vm344, 0.0
          %358 = vst.msk [vmem:[#allocation2 + $0x68] sm:$0xff] %vm344, 0.0
          %359 = vst.msk [vmem:[#allocation2 + $0x70] sm:$0xff] %vm344, 0.0
          %360 = vst.msk [vmem:[#allocation2 + $0x78] sm:$0xff] %vm344, 0.0
        $region40: #{tpu_custom_call.1} parent=27 // pred_fallthru
          _
        %s361 = smul.u32 %s28, 128
        %s362 = smul.u32 %s29, 128
        %s363 = sadd.s32 %s362, 128
        %p364 = scmp.lt.s32.totalorder %s361, %s363
        %s365 = sadd.s32 %s361, 128
        %p366 = scmp.lt.s32.totalorder %s362, %s365
        %p367 = pnand %p364, %p366
        %p368 = pneg %p367
        // Predicated region
        $region41: #{tpu_custom_call.1} parent=27 // pred_check
          _
        $region42: #{tpu_custom_call.1} parent=27 // pred_check_branch
          %370 = sbr.rel (%p367) target = $region44
        $region43: #{tpu_custom_call.1} parent=27 // pred_region
          %v371 = vlaneseq
          %v372 = vshrl.u32 %v371, 7
          %v373 = vadd.s32 %v372, 8
          %v374 = vadd.s32 %v372, 16
          %v375 = vadd.s32 %v372, 24
          %v376 = vadd.s32 %v372, 32
          %v377 = vadd.s32 %v372, 40
          %v378 = vadd.s32 %v372, 48
          %v379 = vadd.s32 %v372, 56
          %v380 = vadd.s32 %v372, 64
          %v381 = vadd.s32 %v372, 72
          %v382 = vadd.s32 %v372, 80
          %v383 = vadd.s32 %v372, 88
          %v384 = vadd.s32 %v372, 96
          %v385 = vadd.s32 %v372, 104
          %v386 = vadd.s32 %v372, 112
          %v387 = vadd.s32 %v372, 120
          %v388 = vstv %s361
          %v389 = vadd.s32 %v388, %v372
          %v390 = vadd.s32 %v388, %v373
          %v391 = vadd.s32 %v388, %v374
          %v392 = vadd.s32 %v388, %v375
          %v393 = vadd.s32 %v388, %v376
          %v394 = vadd.s32 %v388, %v377
          %v395 = vadd.s32 %v388, %v378
          %v396 = vadd.s32 %v388, %v379
          %v397 = vadd.s32 %v388, %v380
          %v398 = vadd.s32 %v388, %v381
          %v399 = vadd.s32 %v388, %v382
          %v400 = vadd.s32 %v388, %v383
          %v401 = vadd.s32 %v388, %v384
          %v402 = vadd.s32 %v388, %v385
          %v403 = vadd.s32 %v388, %v386
          %v404 = vadd.s32 %v388, %v387
          %v405 = vlaneseq
          %v406 = vand.u32 %v405, 127
          %v407 = vstv %s362
          %v408 = vadd.s32 %v407, %v406
          %vm409 = vcmp.eq.s32.totalorder %v389, %v408
          %vm410 = vcmp.eq.s32.totalorder %v390, %v408
          %vm411 = vcmp.eq.s32.totalorder %v391, %v408
          %vm412 = vcmp.eq.s32.totalorder %v392, %v408
          %vm413 = vcmp.eq.s32.totalorder %v393, %v408
          %vm414 = vcmp.eq.s32.totalorder %v394, %v408
          %vm415 = vcmp.eq.s32.totalorder %v395, %v408
          %vm416 = vcmp.eq.s32.totalorder %v396, %v408
          %vm417 = vcmp.eq.s32.totalorder %v397, %v408
          %vm418 = vcmp.eq.s32.totalorder %v398, %v408
          %vm419 = vcmp.eq.s32.totalorder %v399, %v408
          %vm420 = vcmp.eq.s32.totalorder %v400, %v408
          %vm421 = vcmp.eq.s32.totalorder %v401, %v408
          %vm422 = vcmp.eq.s32.totalorder %v402, %v408
          %vm423 = vcmp.eq.s32.totalorder %v403, %v408
          %vm424 = vcmp.eq.s32.totalorder %v404, %v408
          %v425 = vsel %vm409, 0.0, %v324
          %v426 = vsel %vm410, 0.0, %v325
          %v427 = vsel %vm411, 0.0, %v326
          %v428 = vsel %vm412, 0.0, %v327
          %v429 = vsel %vm413, 0.0, %v328
          %v430 = vsel %vm414, 0.0, %v329
          %v431 = vsel %vm415, 0.0, %v330
          %v432 = vsel %vm416, 0.0, %v331
          %v433 = vsel %vm417, 0.0, %v332
          %v434 = vsel %vm418, 0.0, %v333
          %v435 = vsel %vm419, 0.0, %v334
          %v436 = vsel %vm420, 0.0, %v335
          %v437 = vsel %vm421, 0.0, %v336
          %v438 = vsel %vm422, 0.0, %v337
          %v439 = vsel %vm423, 0.0, %v338
          %v440 = vsel %vm424, 0.0, %v339
          %v441 = vld [vmem:[#allocation2] sm:$0xff]
          %v442 = vld [vmem:[#allocation2 + $0x8] sm:$0xff]
          %v443 = vld [vmem:[#allocation2 + $0x10] sm:$0xff]
          %v444 = vld [vmem:[#allocation2 + $0x18] sm:$0xff]
          %v445 = vld [vmem:[#allocation2 + $0x20] sm:$0xff]
          %v446 = vld [vmem:[#allocation2 + $0x28] sm:$0xff]
          %v447 = vld [vmem:[#allocation2 + $0x30] sm:$0xff]
          %v448 = vld [vmem:[#allocation2 + $0x38] sm:$0xff]
          %v449 = vld [vmem:[#allocation2 + $0x40] sm:$0xff]
          %v450 = vld [vmem:[#allocation2 + $0x48] sm:$0xff]
          %v451 = vld [vmem:[#allocation2 + $0x50] sm:$0xff]
          %v452 = vld [vmem:[#allocation2 + $0x58] sm:$0xff]
          %v453 = vld [vmem:[#allocation2 + $0x60] sm:$0xff]
          %v454 = vld [vmem:[#allocation2 + $0x68] sm:$0xff]
          %v455 = vld [vmem:[#allocation2 + $0x70] sm:$0xff]
          %v456 = vld [vmem:[#allocation2 + $0x78] sm:$0xff]
          %457 = vmax.xlane.f32.xlu0 %v425
          %v458 = vpop.xlane.xlu0 %457
          %459 = vmax.xlane.f32.xlu0 %v426
          %v460 = vpop.xlane.xlu0 %459
          %461 = vmax.xlane.f32.xlu0 %v427
          %v462 = vpop.xlane.xlu0 %461
          %463 = vmax.xlane.f32.xlu0 %v428
          %v464 = vpop.xlane.xlu0 %463
          %465 = vmax.xlane.f32.xlu0 %v429
          %v466 = vpop.xlane.xlu0 %465
          %467 = vmax.xlane.f32.xlu0 %v430
          %v468 = vpop.xlane.xlu0 %467
          %469 = vmax.xlane.f32.xlu0 %v431
          %v470 = vpop.xlane.xlu0 %469
          %471 = vmax.xlane.f32.xlu0 %v432
          %v472 = vpop.xlane.xlu0 %471
          %473 = vmax.xlane.f32.xlu0 %v433
          %v474 = vpop.xlane.xlu0 %473
          %475 = vmax.xlane.f32.xlu0 %v434
          %v476 = vpop.xlane.xlu0 %475
          %477 = vmax.xlane.f32.xlu0 %v435
          %v478 = vpop.xlane.xlu0 %477
          %479 = vmax.xlane.f32.xlu0 %v436
          %v480 = vpop.xlane.xlu0 %479
          %481 = vmax.xlane.f32.xlu0 %v437
          %v482 = vpop.xlane.xlu0 %481
          %483 = vmax.xlane.f32.xlu0 %v438
          %v484 = vpop.xlane.xlu0 %483
          %485 = vmax.xlane.f32.xlu0 %v439
          %v486 = vpop.xlane.xlu0 %485
          %487 = vmax.xlane.f32.xlu0 %v440
          %v488 = vpop.xlane.xlu0 %487
          %v489 = vmax.f32 %v441, %v458
          %v490 = vmax.f32 %v442, %v460
          %v491 = vmax.f32 %v443, %v462
          %v492 = vmax.f32 %v444, %v464
          %v493 = vmax.f32 %v445, %v466
          %v494 = vmax.f32 %v446, %v468
          %v495 = vmax.f32 %v447, %v470
          %v496 = vmax.f32 %v448, %v472
          %v497 = vmax.f32 %v449, %v474
          %v498 = vmax.f32 %v450, %v476
          %v499 = vmax.f32 %v451, %v478
          %v500 = vmax.f32 %v452, %v480
          %v501 = vmax.f32 %v453, %v482
          %v502 = vmax.f32 %v454, %v484
          %v503 = vmax.f32 %v455, %v486
          %v504 = vmax.f32 %v456, %v488
          %vm505 = vcmask 7168
          %506 = vst.msk [vmem:[#allocation2] sm:$0xff] %vm505, %v489
          %507 = vst.msk [vmem:[#allocation2 + $0x8] sm:$0xff] %vm505, %v490
          %508 = vst.msk [vmem:[#allocation2 + $0x10] sm:$0xff] %vm505, %v491
          %509 = vst.msk [vmem:[#allocation2 + $0x18] sm:$0xff] %vm505, %v492
          %510 = vst.msk [vmem:[#allocation2 + $0x20] sm:$0xff] %vm505, %v493
          %511 = vst.msk [vmem:[#allocation2 + $0x28] sm:$0xff] %vm505, %v494
          %512 = vst.msk [vmem:[#allocation2 + $0x30] sm:$0xff] %vm505, %v495
          %513 = vst.msk [vmem:[#allocation2 + $0x38] sm:$0xff] %vm505, %v496
          %514 = vst.msk [vmem:[#allocation2 + $0x40] sm:$0xff] %vm505, %v497
          %515 = vst.msk [vmem:[#allocation2 + $0x48] sm:$0xff] %vm505, %v498
          %516 = vst.msk [vmem:[#allocation2 + $0x50] sm:$0xff] %vm505, %v499
          %517 = vst.msk [vmem:[#allocation2 + $0x58] sm:$0xff] %vm505, %v500
          %518 = vst.msk [vmem:[#allocation2 + $0x60] sm:$0xff] %vm505, %v501
          %519 = vst.msk [vmem:[#allocation2 + $0x68] sm:$0xff] %vm505, %v502
          %520 = vst.msk [vmem:[#allocation2 + $0x70] sm:$0xff] %vm505, %v503
          %521 = vst.msk [vmem:[#allocation2 + $0x78] sm:$0xff] %vm505, %v504
          %v522 = vmax.f32 %v425, %v429
          %v523 = vmax.f32 %v426, %v430
          %v524 = vmax.f32 %v427, %v431
          %v525 = vmax.f32 %v428, %v432
          %v526 = vmax.f32 %v522, %v433
          %v527 = vmax.f32 %v523, %v434
          %v528 = vmax.f32 %v524, %v435
          %v529 = vmax.f32 %v525, %v436
          %v530 = vmax.f32 %v526, %v437
          %v531 = vmax.f32 %v527, %v438
          %v532 = vmax.f32 %v528, %v439
          %v533 = vmax.f32 %v529, %v440
          %v534 = vmax.f32 %v530, %v531
          %v535 = vmax.f32 %v532, %v533
          %v536 = vmax.f32 %v534, %v535
          %v537 = vrot.slane %v536, 4
          %v538 = vmax.f32 %v536, %v537
          %v539 = vrot.slane %v538, 2
          %v540 = vmax.f32 %v538, %v539
          %v541 = vrot.slane %v540, 1
          %v542 = vmax.f32 %v540, %v541
          %s543 = sshra.s32 %s362, 7
          %s544 = sand.u32 %s362, 127
          %s545 = scalar_lea.vmem %s254, %s543 [#allocation8]
          %v546 = vlaneseq
          %vm547 = vcmp.ge.s32.totalorder %v546, 0
          %vm548 = vcmp.lt.s32.totalorder %v546, 128
          %vm549 = vmand %vm547, %vm548
          %550 = vst.msk [vmem:[%s545] sm:$0x1] %vm549, %v542
        $region44: #{tpu_custom_call.1} parent=27 // pred_fallthru
          _
        %p551 = pneg %p368
        // Predicated region
        $region45: #{tpu_custom_call.1} parent=27 // pred_check
          _
        $region46: #{tpu_custom_call.1} parent=27 // pred_check_branch
          %553 = sbr.rel (%p368) target = $region48
        $region47: #{tpu_custom_call.1} parent=27 // pred_region
          %v554 = vld [vmem:[#allocation2] sm:$0xff]
          %v555 = vld [vmem:[#allocation2 + $0x8] sm:$0xff]
          %v556 = vld [vmem:[#allocation2 + $0x10] sm:$0xff]
          %v557 = vld [vmem:[#allocation2 + $0x18] sm:$0xff]
          %v558 = vld [vmem:[#allocation2 + $0x20] sm:$0xff]
          %v559 = vld [vmem:[#allocation2 + $0x28] sm:$0xff]
          %v560 = vld [vmem:[#allocation2 + $0x30] sm:$0xff]
          %v561 = vld [vmem:[#allocation2 + $0x38] sm:$0xff]
          %v562 = vld [vmem:[#allocation2 + $0x40] sm:$0xff]
          %v563 = vld [vmem:[#allocation2 + $0x48] sm:$0xff]
          %v564 = vld [vmem:[#allocation2 + $0x50] sm:$0xff]
          %v565 = vld [vmem:[#allocation2 + $0x58] sm:$0xff]
          %v566 = vld [vmem:[#allocation2 + $0x60] sm:$0xff]
          %v567 = vld [vmem:[#allocation2 + $0x68] sm:$0xff]
          %v568 = vld [vmem:[#allocation2 + $0x70] sm:$0xff]
          %v569 = vld [vmem:[#allocation2 + $0x78] sm:$0xff]
          %570 = vmax.xlane.f32.xlu0 %v324
          %v571 = vpop.xlane.xlu0 %570
          %572 = vmax.xlane.f32.xlu0 %v325
          %v573 = vpop.xlane.xlu0 %572
          %574 = vmax.xlane.f32.xlu0 %v326
          %v575 = vpop.xlane.xlu0 %574
          %576 = vmax.xlane.f32.xlu0 %v327
          %v577 = vpop.xlane.xlu0 %576
          %578 = vmax.xlane.f32.xlu0 %v328
          %v579 = vpop.xlane.xlu0 %578
          %580 = vmax.xlane.f32.xlu0 %v329
          %v581 = vpop.xlane.xlu0 %580
          %582 = vmax.xlane.f32.xlu0 %v330
          %v583 = vpop.xlane.xlu0 %582
          %584 = vmax.xlane.f32.xlu0 %v331
          %v585 = vpop.xlane.xlu0 %584
          %586 = vmax.xlane.f32.xlu0 %v332
          %v587 = vpop.xlane.xlu0 %586
          %588 = vmax.xlane.f32.xlu0 %v333
          %v589 = vpop.xlane.xlu0 %588
          %590 = vmax.xlane.f32.xlu0 %v334
          %v591 = vpop.xlane.xlu0 %590
          %592 = vmax.xlane.f32.xlu0 %v335
          %v593 = vpop.xlane.xlu0 %592
          %594 = vmax.xlane.f32.xlu0 %v336
          %v595 = vpop.xlane.xlu0 %594
          %596 = vmax.xlane.f32.xlu0 %v337
          %v597 = vpop.xlane.xlu0 %596
          %598 = vmax.xlane.f32.xlu0 %v338
          %v599 = vpop.xlane.xlu0 %598
          %600 = vmax.xlane.f32.xlu0 %v339
          %v601 = vpop.xlane.xlu0 %600
          %v602 = vmax.f32 %v554, %v571
          %v603 = vmax.f32 %v555, %v573
          %v604 = vmax.f32 %v556, %v575
          %v605 = vmax.f32 %v557, %v577
          %v606 = vmax.f32 %v558, %v579
          %v607 = vmax.f32 %v559, %v581
          %v608 = vmax.f32 %v560, %v583
          %v609 = vmax.f32 %v561, %v585
          %v610 = vmax.f32 %v562, %v587
          %v611 = vmax.f32 %v563, %v589
          %v612 = vmax.f32 %v564, %v591
          %v613 = vmax.f32 %v565, %v593
          %v614 = vmax.f32 %v566, %v595
          %v615 = vmax.f32 %v567, %v597
          %v616 = vmax.f32 %v568, %v599
          %v617 = vmax.f32 %v569, %v601
          %vm618 = vcmask 7168
          %619 = vst.msk [vmem:[#allocation2] sm:$0xff] %vm618, %v602
          %620 = vst.msk [vmem:[#allocation2 + $0x8] sm:$0xff] %vm618, %v603
          %621 = vst.msk [vmem:[#allocation2 + $0x10] sm:$0xff] %vm618, %v604
          %622 = vst.msk [vmem:[#allocation2 + $0x18] sm:$0xff] %vm618, %v605
          %623 = vst.msk [vmem:[#allocation2 + $0x20] sm:$0xff] %vm618, %v606
          %624 = vst.msk [vmem:[#allocation2 + $0x28] sm:$0xff] %vm618, %v607
          %625 = vst.msk [vmem:[#allocation2 + $0x30] sm:$0xff] %vm618, %v608
          %626 = vst.msk [vmem:[#allocation2 + $0x38] sm:$0xff] %vm618, %v609
          %627 = vst.msk [vmem:[#allocation2 + $0x40] sm:$0xff] %vm618, %v610
          %628 = vst.msk [vmem:[#allocation2 + $0x48] sm:$0xff] %vm618, %v611
          %629 = vst.msk [vmem:[#allocation2 + $0x50] sm:$0xff] %vm618, %v612
          %630 = vst.msk [vmem:[#allocation2 + $0x58] sm:$0xff] %vm618, %v613
          %631 = vst.msk [vmem:[#allocation2 + $0x60] sm:$0xff] %vm618, %v614
          %632 = vst.msk [vmem:[#allocation2 + $0x68] sm:$0xff] %vm618, %v615
          %633 = vst.msk [vmem:[#allocation2 + $0x70] sm:$0xff] %vm618, %v616
          %634 = vst.msk [vmem:[#allocation2 + $0x78] sm:$0xff] %vm618, %v617
          %v635 = vmax.f32 %v324, %v328
          %v636 = vmax.f32 %v325, %v329
          %v637 = vmax.f32 %v326, %v330
          %v638 = vmax.f32 %v327, %v331
          %v639 = vmax.f32 %v635, %v332
          %v640 = vmax.f32 %v636, %v333
          %v641 = vmax.f32 %v637, %v334
          %v642 = vmax.f32 %v638, %v335
          %v643 = vmax.f32 %v639, %v336
          %v644 = vmax.f32 %v640, %v337
          %v645 = vmax.f32 %v641, %v338
          %v646 = vmax.f32 %v642, %v339
          %v647 = vmax.f32 %v643, %v644
          %v648 = vmax.f32 %v645, %v646
          %v649 = vmax.f32 %v647, %v648
          %v650 = vrot.slane %v649, 4
          %v651 = vmax.f32 %v649, %v650
          %v652 = vrot.slane %v651, 2
          %v653 = vmax.f32 %v651, %v652
          %v654 = vrot.slane %v653, 1
          %v655 = vmax.f32 %v653, %v654
          %s656 = sshra.s32 %s362, 7
          %s657 = sand.u32 %s362, 127
          %s658 = scalar_lea.vmem %s254, %s656 [#allocation8]
          %v659 = vlaneseq
          %vm660 = vcmp.ge.s32.totalorder %v659, 0
          %vm661 = vcmp.lt.s32.totalorder %v659, 128
          %vm662 = vmand %vm660, %vm661
          %663 = vst.msk [vmem:[%s658] sm:$0x1] %vm662, %v655
        $region48: #{tpu_custom_call.1} parent=27 // pred_fallthru
          _
        %p664 = scmp.eq.s32.totalorder %s29, 1
        // Predicated region
        $region49: #{tpu_custom_call.1} parent=27 // pred_check
          %p665 = pneg %p664
        $region50: #{tpu_custom_call.1} parent=27 // pred_check_branch
          %667 = sbr.rel (%p665) target = $region52
        $region51: #{tpu_custom_call.1} parent=27 // pred_region
          %v668 = vld [vmem:[#allocation2] sm:$0xff]
          %v669 = vld [vmem:[#allocation2 + $0x8] sm:$0xff]
          %v670 = vld [vmem:[#allocation2 + $0x10] sm:$0xff]
          %v671 = vld [vmem:[#allocation2 + $0x18] sm:$0xff]
          %v672 = vld [vmem:[#allocation2 + $0x20] sm:$0xff]
          %v673 = vld [vmem:[#allocation2 + $0x28] sm:$0xff]
          %v674 = vld [vmem:[#allocation2 + $0x30] sm:$0xff]
          %v675 = vld [vmem:[#allocation2 + $0x38] sm:$0xff]
          %v676 = vld [vmem:[#allocation2 + $0x40] sm:$0xff]
          %v677 = vld [vmem:[#allocation2 + $0x48] sm:$0xff]
          %v678 = vld [vmem:[#allocation2 + $0x50] sm:$0xff]
          %v679 = vld [vmem:[#allocation2 + $0x58] sm:$0xff]
          %v680 = vld [vmem:[#allocation2 + $0x60] sm:$0xff]
          %v681 = vld [vmem:[#allocation2 + $0x68] sm:$0xff]
          %v682 = vld [vmem:[#allocation2 + $0x70] sm:$0xff]
          %v683 = vld [vmem:[#allocation2 + $0x78] sm:$0xff]
          %vm684 = vcmask 7168
          %v685 = vsel %vm684, %v668, 0.0
          %v686 = vsel %vm684, %v669, 0.0
          %v687 = vadd.f32 %v685, %v686
          %v688 = vsel %vm684, %v670, 0.0
          %v689 = vadd.f32 %v687, %v688
          %v690 = vsel %vm684, %v671, 0.0
          %v691 = vadd.f32 %v689, %v690
          %v692 = vsel %vm684, %v672, 0.0
          %v693 = vadd.f32 %v691, %v692
          %v694 = vsel %vm684, %v673, 0.0
          %v695 = vadd.f32 %v693, %v694
          %v696 = vsel %vm684, %v674, 0.0
          %v697 = vadd.f32 %v695, %v696
          %v698 = vsel %vm684, %v675, 0.0
          %v699 = vadd.f32 %v697, %v698
          %v700 = vsel %vm684, %v676, 0.0
          %v701 = vadd.f32 %v699, %v700
          %v702 = vsel %vm684, %v677, 0.0
          %v703 = vadd.f32 %v701, %v702
          %v704 = vsel %vm684, %v678, 0.0
          %v705 = vadd.f32 %v703, %v704
          %v706 = vsel %vm684, %v679, 0.0
          %v707 = vadd.f32 %v705, %v706
          %v708 = vsel %vm684, %v680, 0.0
          %v709 = vadd.f32 %v707, %v708
          %v710 = vsel %vm684, %v681, 0.0
          %v711 = vadd.f32 %v709, %v710
          %v712 = vsel %vm684, %v682, 0.0
          %v713 = vadd.f32 %v711, %v712
          %v714 = vsel %vm684, %v683, 0.0
          %v715 = vadd.f32 %v713, %v714
          %716 = vadd.xlane.f32.xlu0 %v715
          %v717 = vpop.xlane.xlu0 %716
          %v718 = vrot.slane %v717, 4
          %v719 = vadd.f32 %v717, %v718
          %v720 = vrot.slane %v719, 2
          %v721 = vadd.f32 %v719, %v720
          %v722 = vrot.slane %v721, 1
          %v723 = vadd.f32 %v721, %v722
          %s724 = vtos %v723
          %v725 = vstv %s724
          %vm726 = vcmask 0
          %727 = vst.msk [vmem:[%s259] sm:$0x1] %vm726, %v725
        $region52: #{tpu_custom_call.1} parent=27 // pred_fallthru
          _
        %p728 = scmp.lt.s32.totalorder %s28, 1
        %s729 = scalar_select %p728, %s28, 1
        %s730 = scalar_lea.vmem %s2, %s729
        %s731 = sand.u32 %s126, 1
        %s732 = scalar_lea.sflag [#allocation5], %s731
        %s733 = sand.u32 %s126, 1
        %s734 = smul.addr %s733, 2
        %s735 = scalar_lea.vmem [#allocation8], %s734
        // Predicated region
        $region53: #{tpu_custom_call.1} parent=27 // pred_check
          %p736 = pneg %p110
        $region54: #{tpu_custom_call.1} parent=27 // pred_check_branch
          %738 = sbr.rel (%p736) target = $region56
        $region55: #{tpu_custom_call.1} parent=27 // pred_region
          _
        $region56: #{tpu_custom_call.1} parent=27 // pred_fallthru
          _
        // Predicated region
        $region57: #{tpu_custom_call.1} parent=27 // pred_check
          %p739 = pneg %p136
        $region58: #{tpu_custom_call.1} parent=27 // pred_check_branch
          %741 = sbr.rel (%p739) target = $region60
        $region59: #{tpu_custom_call.1} parent=27 // pred_region
          %s743 = ssub.s32 32, 32
          %744 = vsyncadd %s732, %s743
          %s745 = smul.addr %s28, 2
          %s746 = smul.addr %s745, 16
          %s747 = scalar_lea.hbm %s3, %s746
          %s749 = sshll.u32 %s735, 4
          %s750 = int_to_ptr.vmem [resolvable:$true] %s749
          %752 = dma.vmem_to_hbm [thread:$0]  %s750, 32, %s747, %s732
        $region60: #{tpu_custom_call.1} parent=27 // pred_fallthru
          _
      $region28: #{tpu_custom_call.1} parent=5 // pred_fallthru
        _
      %p753 = scmp.le.s32.totalorder 2, %s19
      // Predicated region
      $region61: #{tpu_custom_call.1} parent=5 // pred_check
        %p754 = pneg %p753
      $region62: #{tpu_custom_call.1} parent=5 // pred_check_branch
        %756 = sbr.rel (%p754) target = $region64
      $region63: #{tpu_custom_call.1} parent=5 // pred_region
        %s757 = ssub.s32 %s19, 2
        // Predicated region
        $region65: #{tpu_custom_call.1} parent=63 // pred_check
          %p758 = pneg %p116
        $region66: #{tpu_custom_call.1} parent=63 // pred_check_branch
          %760 = sbr.rel (%p758) target = $region68
        $region67: #{tpu_custom_call.1} parent=63 // pred_region
          %p761 = scmp.lt.s32.totalorder %s30, 1
          %s762 = scalar_select %p761, %s30, 1
          %s763 = scalar_lea.vmem %s2, %s762
        $region68: #{tpu_custom_call.1} parent=63 // pred_fallthru
          _
        // Predicated region
        $region69: #{tpu_custom_call.1} parent=63 // pred_check
          %p764 = pneg %p142
        $region70: #{tpu_custom_call.1} parent=63 // pred_check_branch
          %766 = sbr.rel (%p764) target = $region72
        $region71: #{tpu_custom_call.1} parent=63 // pred_region
          %s767 = sand.u32 %s127, 1
          %s768 = scalar_lea.sflag [#allocation5], %s767
          %s769 = sand.u32 %s127, 1
          %s770 = smul.addr %s769, 2
          %s771 = scalar_lea.vmem [#allocation8], %s770
          %772 = dma.done %s768, 32
        $region72: #{tpu_custom_call.1} parent=63 // pred_fallthru
          _
      $region64: #{tpu_custom_call.1} parent=5 // pred_fallthru
        _
    $region6: #{tpu_custom_call.1} parent=1 // loop_footer
      %s23 = sadd.s32 1, %s19
    $region7: #{tpu_custom_call.1} parent=1 // loop_footer_branch
      %18 = sbr.rel target = $region3
    $region8: #{tpu_custom_call.1} parent=1 // loop_exit
      _
    %773 = vsyncpa [#allocation4], 1
    %s774 = scalar_lea.sflag [#allocation4], 1
    %775 = vsyncpa %s774, 1
    %776 = vsyncpa [#allocation7], 1
    %s777 = scalar_lea.sflag [#allocation7], 1
    %778 = vsyncpa %s777, 1
    %779 = vsyncpa [#allocation5], 1
    %s780 = scalar_lea.sflag [#allocation5], 1
    %781 = vsyncpa %s780, 1

</llo_original>
